<compile_context>
chip_gen: v6e
topology: v6e:2x2x1
jax: 0.10.0
libtpu: 0.0.40
codegen_flags: <defaults>
</compile_context>

<pallas_src>
import functools
import math

import jax
import jax.numpy as jnp
from jax.experimental import pallas as pl
from jax.experimental.pallas import tpu as pltpu


@functools.lru_cache(maxsize=None)
def _vmem_limit():
    """Generation-aware VMEM budget: ~3/4 of physical, capped at 96 MiB.
    -> ~48 MiB on v7x (64 MiB physical), 96 MiB on v5e/v6e (128 MiB)."""
    try:
        cap = pltpu.get_tpu_info().vmem_capacity_bytes
    except Exception:
        cap = 128 * 1024 * 1024
    return int(min(cap * 3 // 4, 96 * 1024 * 1024))


def _sublane(dtype):
    # Native sublane tiling: 8 rows for 4-byte dtypes, 16 for 2-byte dtypes.
    return 8 * (4 // jnp.dtype(dtype).itemsize)


def _pick_tile(dim, target, base):
    """Largest multiple of `base` that divides `dim` and is <= `target`;
    falls back to the full dimension (always a legal block).  NOTE: for
    awkward (prime-ish) dims the fallback is the whole axis; keep an eye on
    VMEM in that case."""
    if dim <= target:
        return dim
    t = (target // base) * base
    while t >= base:
        if dim % t == 0:
            return t
        t -= base
    return dim


# ----------------------------------------------------------------------------
# Conv1D: y = x @ W + b.  Full-K panel per tile -> each output tile written
# exactly once, both grid axes "parallel" (good megacore / dual-TC sharding).
# ----------------------------------------------------------------------------
def _linear_kernel(x_ref, w_ref, b_ref, o_ref):
    # x_ref: (tm, nx), w_ref: (nx, tn), b_ref: (1, tn) f32, o_ref: (tm, tn)
    acc = jnp.dot(x_ref[...], w_ref[...], preferred_element_type=jnp.float32)
    o_ref[...] = (acc + b_ref[...]).astype(o_ref.dtype)


def conv1d_forward(x, w, b, *, out_dtype=None, m_tile=512, n_tile=512):
    """GPT-2 Conv1D semantics: x:[B,S,nx], w:[nx,nf], b:[nf] -> [B,S,nf].
    For GPT-2 sizes (nx <= 1600) a full-K panel easily fits VMEM."""
    B, S, nx = x.shape
    nf = w.shape[1]
    out_dtype = x.dtype if out_dtype is None else out_dtype

    M = B * S
    x2 = x.reshape(M, nx)
    b2 = b.astype(jnp.float32).reshape(1, nf)

    tm = _pick_tile(M, m_tile, _sublane(x.dtype))
    tn = _pick_tile(nf, n_tile, 128)

    out2 = pl.pallas_call(
        _linear_kernel,
        out_shape=jax.ShapeDtypeStruct((M, nf), out_dtype),
        grid_spec=pltpu.PrefetchScalarGridSpec(
            num_scalar_prefetch=0,
            grid=(M // tm, nf // tn),
            in_specs=[
                pl.BlockSpec((tm, nx), lambda i, j: (i, 0)),
                pl.BlockSpec((nx, tn), lambda i, j: (0, j)),
                pl.BlockSpec((1, tn), lambda i, j: (0, j)),
            ],
            out_specs=pl.BlockSpec((tm, tn), lambda i, j: (i, j)),
        ),
        compiler_params=pltpu.CompilerParams(
            dimension_semantics=("parallel", "parallel"),
            vmem_limit_bytes=_vmem_limit()),
    )(x2, w, b2)
    return out2.reshape(B, S, nf)


# ----------------------------------------------------------------------------
# Flash-style block-causal attention over a packed [B, S, 3E] qkv tensor.
# 1/sqrt(D) is already folded into the Q projection weights.
# ----------------------------------------------------------------------------
def _flash_attn_kernel(q_ref, k_ref, v_ref, o_ref,
                       q_sc, m_ref, l_ref, acc_ref, *,
                       num_heads, head_dim, masked_bias, tq, tkv,
                       exp_dtype, approx_recip):
    qi = pl.program_id(1)
    ki = pl.program_id(2)
    H, D = num_heads, head_dim

    q_start = qi * tq
    k_start = ki * tkv
    q_last = q_start + tq - 1
    k_last = k_start + tkv - 1

    @pl.when(ki == 0)
    def _init():
        # Split heads once per q tile (scale already folded into w_attn).
        q_sc[...] = q_ref[0].reshape(tq, H, D)
        m_ref[...] = jnp.full_like(m_ref, -jnp.inf)
        l_ref[...] = jnp.zeros_like(l_ref)
        acc_ref[...] = jnp.zeros_like(acc_ref)

    def _scores():
        k3 = k_ref[0].reshape(tkv, H, D)
        # Batched-over-heads QK^T; MXU consumes K without an explicit .T,
        # accumulation in f32.
        return jnp.einsum("qhd,khd->hqk", q_sc[...], k3,
                          preferred_element_type=jnp.float32)  # (H, tq, tkv)

    def _update(s):
        v3 = v_ref[0].reshape(tkv, H, D)
        m_prev = m_ref[...]                                    # (H, tq) f32
        m_new = jnp.maximum(m_prev, jnp.max(s, axis=-1))       # (H, tq)
        alpha = jnp.exp(m_prev - m_new)                        # (H, tq) f32
        # exp in exp_dtype (bf16 on the default path: ~2x EUP throughput on
        # v6e/v7x); softmax stats and accumulators stay f32.
        p = jnp.exp((s - m_new[..., None]).astype(exp_dtype))  # (H, tq, tkv)
        l_ref[...] = alpha * l_ref[...] + jnp.sum(
            p.astype(jnp.float32), axis=-1)
        pv = jnp.einsum("hqk,khd->hqd", p.astype(v3.dtype), v3,
                        preferred_element_type=jnp.float32)    # (H, tq, D)
        acc_ref[...] = alpha[..., None] * acc_ref[...] + pv
        m_ref[...] = m_new

    # Fast path: block fully below the causal diagonal -> no mask machinery.
    @pl.when(k_last <= q_start)
    def _fast():
        _update(_scores())

    # Masked path: only blocks straddling the diagonal pay for iota + select.
    @pl.when(jnp.logical_and(k_last > q_start, k_start <= q_last))
    def _masked():
        s = _scores()
        row = q_start + jax.lax.broadcasted_iota(jnp.int32, (tq, tkv), 0)
        col = k_start + jax.lax.broadcasted_iota(jnp.int32, (tq, tkv), 1)
        s = jnp.where((row >= col)[None, :, :], s, jnp.float32(masked_bias))
        _update(s)

    # Finalize at the LAST CONTRIBUTING kv block for this q tile; later steps
    # (strictly above the diagonal) are pure no-ops (their K/V DMA is elided
    # by the clamped index_map and the output block index is unchanged).
    last_ki = jnp.minimum(pl.num_programs(2) - 1, q_last // tkv)

    @pl.when(ki == last_ki)
    def _finalize():
        if approx_recip:
            inv_l = pl.reciprocal(l_ref[...], approx=True)     # EUP slot
        else:
            inv_l = 1.0 / l_ref[...]                           # exact f32 path
        out = acc_ref[...] * inv_l[..., None]                  # (H, tq, D)
        # Merge heads in-VMEM and store a lane-dense (tq, E) slab.
        out = jnp.transpose(out, (1, 0, 2)).reshape(tq, H * D)
        o_ref[0] = out.astype(o_ref.dtype)


def attention_forward(qkv, *, num_heads, masked_bias=-10000.0, out_dtype=None,
                      q_tile=256, kv_tile=256):
    """Causal self-attention over packed qkv [B, S, 3E] -> merged [B, S, E].
    The 1/sqrt(head_dim) scale must already be folded into the Q projection."""
    B, S, threeE = qkv.shape
    E = threeE // 3
    H = num_heads
    D = E // H
    out_dtype = qkv.dtype if out_dtype is None else out_dtype

    sub = _sublane(qkv.dtype)
    tq = _pick_tile(S, q_tile, sub)
    tkv = _pick_tile(S, kv_tile, sub)

    low_precision = jnp.dtype(qkv.dtype) != jnp.dtype(jnp.float32)
    exp_dtype = jnp.bfloat16 if low_precision else jnp.float32
    approx_recip = low_precision

    kern = functools.partial(
        _flash_attn_kernel, num_heads=H, head_dim=D,
        masked_bias=float(masked_bias), tq=tq, tkv=tkv,
        exp_dtype=exp_dtype, approx_recip=approx_recip)

    def kv_block(qi, ki):
        # Clamp: steps above the diagonal re-use the previous kv block, so
        # Pallas elides their HBM DMA (block index unchanged => no re-fetch).
        return jnp.minimum(ki, ((qi + 1) * tq - 1) // tkv)

    if E % 128 == 0:
        # Slice q/k/v directly out of the packed qkv tensor via BlockSpec
        # index_map column-block offsets (0, E, 2E): no split copies.
        in_specs = [
            pl.BlockSpec((1, tq, E), lambda b, qi, ki: (b, qi, 0)),
            pl.BlockSpec((1, tkv, E), lambda b, qi, ki: (b, kv_block(qi, ki), 1)),
            pl.BlockSpec((1, tkv, E), lambda b, qi, ki: (b, kv_block(qi, ki), 2)),
        ]
        args = (qkv, qkv, qkv)
    else:
        # E not lane-aligned (e.g. GPT2-XL E=1600): fall back to full-width
        # [B, S, E] operands (last block dim == full array dim).
        q, k, v = jnp.split(qkv, 3, axis=-1)
        in_specs = [
            pl.BlockSpec((1, tq, E), lambda b, qi, ki: (b, qi, 0)),
            pl.BlockSpec((1, tkv, E), lambda b, qi, ki: (b, kv_block(qi, ki), 0)),
            pl.BlockSpec((1, tkv, E), lambda b, qi, ki: (b, kv_block(qi, ki), 0)),
        ]
        args = (q, k, v)

    return pl.pallas_call(
        kern,
        out_shape=jax.ShapeDtypeStruct((B, S, E), out_dtype),
        grid_spec=pltpu.PrefetchScalarGridSpec(
            num_scalar_prefetch=0,
            grid=(B, S // tq, S // tkv),
            in_specs=in_specs,
            out_specs=pl.BlockSpec((1, tq, E), lambda b, qi, ki: (b, qi, 0)),
            scratch_shapes=[
                pltpu.VMEM((tq, H, D), qkv.dtype),   # head-split q (per q tile)
                pltpu.VMEM((H, tq), jnp.float32),    # running max m (lane-dense)
                pltpu.VMEM((H, tq), jnp.float32),    # running denominator l
                pltpu.VMEM((H, tq, D), jnp.float32),  # output accumulator
            ],
        ),
        compiler_params=pltpu.CompilerParams(
            dimension_semantics=("parallel", "parallel", "arbitrary"),
            vmem_limit_bytes=_vmem_limit()),
    )(*args)


# ----------------------------------------------------------------------------
# Parameter preparation (one-time) + GPT2Attention forward
# ----------------------------------------------------------------------------
def prepare_attention_params(params, *, num_heads, compute_dtype=jnp.bfloat16):
    """One-time prep: fold 1/sqrt(head_dim) into the Q columns of c_attn and
    pre-cast weights to the MXU compute dtype (biases stay f32)."""
    cd = jnp.dtype(compute_dtype)
    w_attn = jnp.asarray(params["w_attn"], jnp.float32)
    b_attn = jnp.asarray(params["b_attn"], jnp.float32)
    E = w_attn.shape[0]
    D = E // num_heads
    scale = 1.0 / math.sqrt(D)
    col_scale = jnp.concatenate(
        [jnp.full((E,), scale, jnp.float32), jnp.ones((2 * E,), jnp.float32)])
    return {
        "w_attn": (w_attn * col_scale[None, :]).astype(cd),
        "b_attn": b_attn * col_scale,                       # f32
        "w_proj": jnp.asarray(params["w_proj"]).astype(cd),
        "b_proj": jnp.asarray(params["b_proj"], jnp.float32),
    }


def gpt2_attention_forward(hidden_states, prepared, *, num_heads,
                           q_tile=256, kv_tile=256, out_dtype=jnp.float32):
    """Self-attention forward (no cache, eval mode) on prepared params."""
    cd = prepared["w_attn"].dtype
    x = hidden_states.astype(cd)

    # c_attn -> packed [B, S, 3E] in the compute dtype (bf16 by default:
    # halves the HBM round-trip of the qkv intermediate).
    qkv = conv1d_forward(x, prepared["w_attn"], prepared["b_attn"],
                         out_dtype=cd)

    # Causal flash attention; output already head-merged, lane-dense [B, S, E].
    attn = attention_forward(qkv, num_heads=num_heads, out_dtype=cd,
                             q_tile=q_tile, kv_tile=kv_tile)

    # c_proj (final output in f32, matching the f32 PyTorch module).
    return conv1d_forward(attn, prepared["w_proj"], prepared["b_proj"],
                          out_dtype=out_dtype)


# ----------------------------------------------------------------------------
# Pure-JAX reference for validation
# ----------------------------------------------------------------------------
def reference_forward(hidden_states, params, *, num_heads):
    B, S, E = hidden_states.shape
    D = E // num_heads
    qkv = hidden_states @ params["w_attn"] + params["b_attn"]
    q, k, v = jnp.split(qkv, 3, axis=-1)
    sh = lambda t: t.reshape(B, S, num_heads, D).transpose(0, 2, 1, 3)
    q, k, v = sh(q), sh(k), sh(v)
    scores = jnp.einsum("bhqd,bhkd->bhqk", q, k) / math.sqrt(D)
    causal = jnp.tril(jnp.ones((S, S), dtype=bool))
    scores = jnp.where(causal[None, None], scores, jnp.float32(-10000.0))
    p = jax.nn.softmax(scores, axis=-1)
    o = jnp.einsum("bhqk,bhkd->bhqd", p, v)
    merged = o.transpose(0, 2, 1, 3).reshape(B, S, E)
    return merged @ params["w_proj"] + params["b_proj"]


if __name__ == "__main__":
    # Small GPT-2-like config with a lane-aligned hidden size:
    # batch=2, seq=16, hidden=128, heads=4 (head_dim=32)
    B, S, E, H = 2, 16, 128, 4

    key = jax.random.PRNGKey(0)
    k_x, k_wa, k_ba, k_wp, k_bp = jax.random.split(key, 5)

    hidden_states = jax.random.normal(k_x, (B, S, E), dtype=jnp.float32)
    params = {
        "w_attn": 0.02 * jax.random.normal(k_wa, (E, 3 * E), dtype=jnp.float32),
        "b_attn": 0.02 * jax.random.normal(k_ba, (3 * E,), dtype=jnp.float32),
        "w_proj": 0.02 * jax.random.normal(k_wp, (E, E), dtype=jnp.float32),
        "b_proj": 0.02 * jax.random.normal(k_bp, (E,), dtype=jnp.float32),
    }

    ref = reference_forward(hidden_states, params, num_heads=H)

    # 1) Exact f32 path (single kv block per q tile at this size).
    p_f32 = prepare_attention_params(params, num_heads=H,
                                     compute_dtype=jnp.float32)
    out = gpt2_attention_forward(hidden_states, p_f32, num_heads=H)
    out = jax.block_until_ready(out)
    assert out.shape == (B, S, E)
    assert jnp.allclose(out, ref, atol=1e-5, rtol=1e-5), "f32 mismatch vs reference"

    # 2) f32 path with tiny tiles: exercises multi-block online softmax, the
    #    fast / masked block paths, the clamped kv index_map and the gated
    #    (last-contributing-block) finalize.
    out_t = gpt2_attention_forward(hidden_states, p_f32, num_heads=H,
                                   q_tile=8, kv_tile=8)
    out_t = jax.block_until_ready(out_t)
    assert jnp.allclose(out_t, ref, atol=1e-5, rtol=1e-5), "tiled f32 mismatch"

    # 3) Default bf16 path: bf16 MXU operands + bf16 softmax exp, f32
    #    accumulation and bf16 intermediates (looser tolerance).
    p_bf16 = prepare_attention_params(params, num_heads=H)
    out_bf = gpt2_attention_forward(hidden_states, p_bf16, num_heads=H)
    out_bf = jax.block_until_ready(out_bf)
    assert jnp.allclose(out_bf, ref, atol=5e-2, rtol=5e-2), "bf16 mismatch"

    print("KERNEL_OK")
</pallas_src>

<mosaic_0001>
module attributes {stable_mosaic.version = 11 : i64} {
  func.func @_linear_kernel(%arg0: i32, %arg1: i32, %arg2: memref<32x128xf32, #tpu.memory_space<vmem>>, %arg3: memref<128x384xf32, #tpu.memory_space<vmem>>, %arg4: memref<1x384xf32, #tpu.memory_space<vmem>>, %arg5: memref<32x384xf32, #tpu.memory_space<vmem>>) attributes {dimension_semantics = [#tpu.dimension_semantics<parallel>, #tpu.dimension_semantics<parallel>], iteration_bounds = array<i64: 1, 1>, scalar_prefetch = 0 : i64, scratch_operands = 0 : i64, tpu.core_type = #tpu.core_type<tc>, window_params = [{transform_indices = @transform_0, window_bounds = array<i64: 32, 128>}, {transform_indices = @transform_1, window_bounds = array<i64: 128, 384>}, {transform_indices = @transform_2, window_bounds = array<i64: 1, 384>}, {transform_indices = @transform_3, window_bounds = array<i64: 32, 384>}]} {
    %c0 = arith.constant 0 : index
    %c0_0 = arith.constant 0 : index
    %0 = vector.load %arg2[%c0, %c0_0] : memref<32x128xf32, #tpu.memory_space<vmem>>, vector<32x128xf32>
    %c0_1 = arith.constant 0 : index
    %c0_2 = arith.constant 0 : index
    %1 = vector.load %arg3[%c0_1, %c0_2] : memref<128x384xf32, #tpu.memory_space<vmem>>, vector<128x384xf32>
    %cst = arith.constant dense<0.000000e+00> : vector<32x384xf32>
    %2 = tpu.matmul %0, %1, %cst {dimension_numbers = #tpu.dot_dimension_numbers<[1], [0], [0], [1], [0, 0, 1, 1], [], []>} : vector<32x128xf32>, vector<128x384xf32>, vector<32x384xf32> -> vector<32x384xf32>
    %c0_3 = arith.constant 0 : index
    %c0_4 = arith.constant 0 : index
    %3 = vector.load %arg4[%c0_3, %c0_4] : memref<1x384xf32, #tpu.memory_space<vmem>>, vector<1x384xf32>
    %4 = vector.broadcast %3 : vector<1x384xf32> to vector<32x384xf32>
    %5 = arith.addf %2, %4 : vector<32x384xf32>
    %c0_5 = arith.constant 0 : index
    %c0_6 = arith.constant 0 : index
    %6 = vector.load %arg5[%c0_5, %c0_6] : memref<32x384xf32, #tpu.memory_space<vmem>>, vector<32x384xf32>
    tpu.vector_store %arg5[%c0_5, %c0_6], %5 {strides = array<i32>} : memref<32x384xf32, #tpu.memory_space<vmem>>, vector<32x384xf32>,
    return
  }
  func.func @transform_0(%arg0: i32, %arg1: i32) -> (i32, i32) {
    %c0_i32 = arith.constant 0 : i32
    %c0_i32_0 = arith.constant 0 : i32
    return %arg0, %c0_i32 : i32, i32
  }
  func.func @transform_1(%arg0: i32, %arg1: i32) -> (i32, i32) {
    %c0_i32 = arith.constant 0 : i32
    %c0_i32_0 = arith.constant 0 : i32
    return %c0_i32, %arg1 : i32, i32
  }
  func.func @transform_2(%arg0: i32, %arg1: i32) -> (i32, i32) {
    %c0_i32 = arith.constant 0 : i32
    %c0_i32_0 = arith.constant 0 : i32
    return %c0_i32, %arg1 : i32, i32
  }
  func.func @transform_3(%arg0: i32, %arg1: i32) -> (i32, i32) {
    %c0_i32 = arith.constant 0 : i32
    return %arg0, %arg1 : i32, i32
  }
}

</mosaic_0001>

<llo_original>
// kernel: tpu_custom_call.1
$region0: #{tpu_custom_call.1}
  #allocation0 [shape = 'u32[]', space=smem, size = 0x4, offset = 0x4, fixed_abs, tag = 'smem constant byte address 0x4 - core index']
  #allocation1 [shape = 'u32[144,128]{1,0:T(1,128)}', space=vmem, size = 0x12000, scoped, tag = 'internal scratch']
  %s0 = inlined_call_operand.hbm [shape: f32[32,128], index: 0, kind: input, shape index: {}]
  %s1 = inlined_call_operand.hbm [shape: f32[128,384], index: 1, kind: input, shape index: {}]
  %s2 = inlined_call_operand.vmem [shape: f32[1,384], index: 2, kind: input, shape index: {}]
  %s3 = inlined_call_operand.hbm [shape: f32[32,384], index: 3, kind: output, shape index: {}]
  %s4 = sld [smem:[#allocation0]]
  $region30: #{tpu_custom_call.1} parent=0
    _
  %s6 = ssub.s32 1, %s4
  %s7 = scalar_select 0, %s6, %s4
  $region1: #{tpu_custom_call.1} parent=0
    #allocation2 [shape = 'u8[16384]{0}', space=vmem, size = 0x4000, scoped, tag = 'input window, operand 0, single buffered']
    #allocation3 [shape = 's32[1]{0}', space=sflag, size = 0x4, scoped, tag = 'scoped memory for tpu_custom_call.1']
    #allocation4 [shape = 's32[1]{0}', space=sflag, size = 0x4, scoped, tag = 'scoped memory for tpu_custom_call.1']
    #allocation5 [shape = 'u8[196608]{0}', space=vmem, size = 0x30000, scoped, tag = 'input window, operand 1, single buffered']
    #allocation6 [shape = 's32[1]{0}', space=sflag, size = 0x4, scoped, tag = 'scoped memory for tpu_custom_call.1']
    #allocation7 [shape = 'u8[49152]{0}', space=vmem, size = 0xc000, scoped, tag = 'output window, operand 0, single buffered']
    %8 = vsyncpa [#allocation3], 0
    %9 = vsyncpa [#allocation6], 0
    %10 = vsyncpa [#allocation4], 0
    // Predicated region
    $region2: #{tpu_custom_call.1} parent=1 // pred_check
      _
    $region3: #{tpu_custom_call.1} parent=1 // pred_check_branch
      %12 = sbr.rel (0) target = $region5
    $region4: #{tpu_custom_call.1} parent=1 // pred_region
      %s14 = ssub.s32 512, 512
      %15 = vsyncadd [#allocation3], %s14
      %s16 = sshll.u32 [#allocation2], 4
      %s17 = int_to_ptr.vmem [resolvable:$true] %s16
      %22 = dma.hbm_to_vmem [thread:$0]  %s0, 512, %s17, [#allocation3], 128, 128, 8
    $region5: #{tpu_custom_call.1} parent=1 // pred_fallthru
      _
    // Predicated region
    $region6: #{tpu_custom_call.1} parent=1 // pred_check
      _
    $region7: #{tpu_custom_call.1} parent=1 // pred_check_branch
      %24 = sbr.rel (0) target = $region9
    $region8: #{tpu_custom_call.1} parent=1 // pred_region
      %s26 = ssub.s32 6144, 6144
      %27 = vsyncadd [#allocation6], %s26
      %s28 = sshll.u32 [#allocation5], 4
      %s29 = int_to_ptr.vmem [resolvable:$true] %s28
      %34 = dma.hbm_to_vmem [thread:$0]  %s1, 6144, %s29, [#allocation6], 384, 384, 24
    $region9: #{tpu_custom_call.1} parent=1 // pred_fallthru
      _
    // Predicated region
    $region10: #{tpu_custom_call.1} parent=1 // pred_check
      _
    $region11: #{tpu_custom_call.1} parent=1 // pred_check_branch
      %36 = sbr.rel (0) target = $region13
    $region12: #{tpu_custom_call.1} parent=1 // pred_region
      _
    $region13: #{tpu_custom_call.1} parent=1 // pred_fallthru
      _
    // Predicated region
    $region14: #{tpu_custom_call.1} parent=1 // pred_check
      _
    $region15: #{tpu_custom_call.1} parent=1 // pred_check_branch
      %38 = sbr.rel (0) target = $region17
    $region16: #{tpu_custom_call.1} parent=1 // pred_region
      %39 = dma.done [#allocation3], 512
    $region17: #{tpu_custom_call.1} parent=1 // pred_fallthru
      _
    // Predicated region
    $region18: #{tpu_custom_call.1} parent=1 // pred_check
      _
    $region19: #{tpu_custom_call.1} parent=1 // pred_check_branch
      %41 = sbr.rel (0) target = $region21
    $region20: #{tpu_custom_call.1} parent=1 // pred_region
      %42 = dma.done [#allocation6], 6144
    $region21: #{tpu_custom_call.1} parent=1 // pred_fallthru
      _
    %v43 = vld [vmem:[#allocation2] sm:$0xff]
    %v44 = vld [vmem:[#allocation2 + $0x8] sm:$0xff]
    %v45 = vld [vmem:[#allocation2 + $0x10] sm:$0xff]
    %v46 = vld [vmem:[#allocation2 + $0x18] sm:$0xff]
    %v47 = vld [vmem:[#allocation5] sm:$0xff]
    %v48 = vld [vmem:[#allocation5 + $0x8] sm:$0xff]
    %v49 = vld [vmem:[#allocation5 + $0x10] sm:$0xff]
    %v50 = vld [vmem:[#allocation5 + $0x18] sm:$0xff]
    %v51 = vld [vmem:[#allocation5 + $0x20] sm:$0xff]
    %v52 = vld [vmem:[#allocation5 + $0x28] sm:$0xff]
    %v53 = vld [vmem:[#allocation5 + $0x30] sm:$0xff]
    %v54 = vld [vmem:[#allocation5 + $0x38] sm:$0xff]
    %v55 = vld [vmem:[#allocation5 + $0x40] sm:$0xff]
    %v56 = vld [vmem:[#allocation5 + $0x48] sm:$0xff]
    %v57 = vld [vmem:[#allocation5 + $0x50] sm:$0xff]
    %v58 = vld [vmem:[#allocation5 + $0x58] sm:$0xff]
    %v59 = vld [vmem:[#allocation5 + $0x60] sm:$0xff]
    %v60 = vld [vmem:[#allocation5 + $0x68] sm:$0xff]
    %v61 = vld [vmem:[#allocation5 + $0x70] sm:$0xff]
    %v62 = vld [vmem:[#allocation5 + $0x78] sm:$0xff]
    %v63 = vld [vmem:[#allocation5 + $0x80] sm:$0xff]
    %v64 = vld [vmem:[#allocation5 + $0x88] sm:$0xff]
    %v65 = vld [vmem:[#allocation5 + $0x90] sm:$0xff]
    %v66 = vld [vmem:[#allocation5 + $0x98] sm:$0xff]
    %v67 = vld [vmem:[#allocation5 + $0xa0] sm:$0xff]
    %v68 = vld [vmem:[#allocation5 + $0xa8] sm:$0xff]
    %v69 = vld [vmem:[#allocation5 + $0xb0] sm:$0xff]
    %v70 = vld [vmem:[#allocation5 + $0xb8] sm:$0xff]
    %v71 = vld [vmem:[#allocation5 + $0xc0] sm:$0xff]
    %v72 = vld [vmem:[#allocation5 + $0xc8] sm:$0xff]
    %v73 = vld [vmem:[#allocation5 + $0xd0] sm:$0xff]
    %v74 = vld [vmem:[#allocation5 + $0xd8] sm:$0xff]
    %v75 = vld [vmem:[#allocation5 + $0xe0] sm:$0xff]
    %v76 = vld [vmem:[#allocation5 + $0xe8] sm:$0xff]
    %v77 = vld [vmem:[#allocation5 + $0xf0] sm:$0xff]
    %v78 = vld [vmem:[#allocation5 + $0xf8] sm:$0xff]
    %v79 = vld [vmem:[#allocation5 + $0x100] sm:$0xff]
    %v80 = vld [vmem:[#allocation5 + $0x108] sm:$0xff]
    %v81 = vld [vmem:[#allocation5 + $0x110] sm:$0xff]
    %v82 = vld [vmem:[#allocation5 + $0x118] sm:$0xff]
    %v83 = vld [vmem:[#allocation5 + $0x120] sm:$0xff]
    %v84 = vld [vmem:[#allocation5 + $0x128] sm:$0xff]
    %v85 = vld [vmem:[#allocation5 + $0x130] sm:$0xff]
    %v86 = vld [vmem:[#allocation5 + $0x138] sm:$0xff]
    %v87 = vld [vmem:[#allocation5 + $0x140] sm:$0xff]
    %v88 = vld [vmem:[#allocation5 + $0x148] sm:$0xff]
    %v89 = vld [vmem:[#allocation5 + $0x150] sm:$0xff]
    %v90 = vld [vmem:[#allocation5 + $0x158] sm:$0xff]
    %v91 = vld [vmem:[#allocation5 + $0x160] sm:$0xff]
    %v92 = vld [vmem:[#allocation5 + $0x168] sm:$0xff]
    %v93 = vld [vmem:[#allocation5 + $0x170] sm:$0xff]
    %v94 = vld [vmem:[#allocation5 + $0x178] sm:$0xff]
    %v95 = vld [vmem:[%s2] sm:$0x7]
    %v97 = vlaneseq
    %v98 = vshrl.u32 %v97, 7
    %v99 = vsub.s32 0, %v98
    %v100 = vrot.slane %v95, %v99
    %v101 = vlaneseq
    %v102 = vshrl.u32 %v101, 7
    %v103 = vsub.s32 1, %v102
    %v104 = vrot.slane %v95, %v103
    %v105 = vlaneseq
    %v106 = vshrl.u32 %v105, 7
    %v107 = vsub.s32 2, %v106
    %v108 = vrot.slane %v95, %v107
    %112 = vmatprep.subr.mxu0 %v93
    %113 = vmatpush1.msra.mxu0 %v92
    %114 = vmatprep.subr.mxu0 %v90
    %115 = vmatpush1.msra.mxu0 %v89
    %116 = vmatprep.subr.mxu0 %v87
    %117 = vmatpush1.msra.mxu0 %v86
    %118 = vmatprep.subr.mxu0 %v84
    %119 = vmatpush1.msra.mxu0 %v83
    %120 = vmatprep.subr.mxu0 %v81
    %121 = vmatpush1.msra.mxu0 %v80
    %122 = vmatprep.subr.mxu0 %v78
    %123 = vmatpush1.msra.mxu0 %v77
    %124 = vmatprep.subr.mxu0 %v75
    %125 = vmatpush1.msra.mxu0 %v74
    %126 = vmatprep.subr.mxu0 %v72
    %127 = vmatpush1.msra.mxu0 %v71
    %128 = vmatprep.subr.mxu0 %v69
    %129 = vmatpush1.msra.mxu0 %v68
    %130 = vmatprep.subr.mxu0 %v66
    %131 = vmatpush1.msra.mxu0 %v65
    %132 = vmatprep.subr.mxu0 %v63
    %133 = vmatpush1.msra.mxu0 %v62
    %134 = vmatprep.subr.mxu0 %v60
    %135 = vmatpush1.msra.mxu0 %v59
    %136 = vmatprep.subr.mxu0 %v57
    %137 = vmatpush1.msra.mxu0 %v56
    %138 = vmatprep.subr.mxu0 %v54
    %139 = vmatpush1.msra.mxu0 %v53
    %140 = vmatprep.subr.mxu0 %v51
    %141 = vmatpush1.msra.mxu0 %v50
    %142 = vmatprep.subr.mxu0 %v48
    %143 = vmatpush1.msra.mxu0 %v47
    %144 = vmatprep.subr.mxu0 0.0
    %145 = vmatpush2.msra.mxu0 0.0
    %146 = vmatprep.subr.mxu0 0.0
    %147 = vmatpush2.msra.mxu0 0.0
    %148 = vmatprep.subr.mxu0 0.0
    %149 = vmatpush2.msra.mxu0 0.0
    %150 = vmatprep.subr.mxu0 0.0
    %151 = vmatpush2.msra.mxu0 0.0
    %152 = vmatprep.subr.mxu0 0.0
    %153 = vmatpush2.msra.mxu0 0.0
    %154 = vmatprep.subr.mxu0 0.0
    %155 = vmatpush2.msra.mxu0 0.0
    %156 = vmatprep.subr.mxu0 0.0
    %157 = vmatpush2.msra.mxu0 0.0
    %158 = vmatprep.subr.mxu0 0.0
    %159 = vmatpush2.msra.mxu0 0.0
    %160 = vmatprep.subr.mxu0 0.0
    %161 = vmatpush2.msra.mxu0 0.0
    %162 = vmatprep.subr.mxu0 0.0
    %163 = vmatpush2.msra.mxu0 0.0
    %164 = vmatprep.subr.mxu0 0.0
    %165 = vmatpush2.msra.mxu0 0.0
    %166 = vmatprep.subr.mxu0 0.0
    %167 = vmatpush2.msra.mxu0 0.0
    %168 = vmatprep.subr.mxu0 0.0
    %169 = vmatpush2.msra.mxu0 0.0
    %170 = vmatprep.subr.mxu0 0.0
    %171 = vmatpush2.msra.mxu0 0.0
    %172 = vmatprep.subr.mxu0 0.0
    %173 = vmatpush2.msra.mxu0 0.0
    %174 = vmatprep.subr.mxu0 0.0
    %175 = vmatpush2.msra.mxu0 0.0
    %176 = vmatprep.mubr.f32.mxu0 0.0
    %177 = vmatmul.mubr.f32.gmra.mxu0 %v43
    %v178 = vpop.f32.mrf.mxu0
    %v179 = vadd.f32 %v100, %v178
    %v180 = vpop.f32.mrf.mxu0
    %v181 = vadd.f32 %v104, %v180
    %182 = vmatprep.mubr.f32.mxu0 0.0
    %183 = vmatmul.mubr.f32.gmra.mxu0 %v44
    %v184 = vpop.f32.mrf.mxu0
    %v185 = vadd.f32 %v100, %v184
    %v186 = vpop.f32.mrf.mxu0
    %v187 = vadd.f32 %v104, %v186
    %188 = vmatprep.mubr.f32.mxu0 0.0
    %189 = vmatmul.mubr.f32.gmra.mxu0 %v45
    %v190 = vpop.f32.mrf.mxu0
    %v191 = vadd.f32 %v100, %v190
    %v192 = vpop.f32.mrf.mxu0
    %v193 = vadd.f32 %v104, %v192
    %194 = vmatprep.mubr.f32.mxu0 0.0
    %195 = vmatmul.mubr.f32.gmra.mxu0 %v46
    %v196 = vpop.f32.mrf.mxu0
    %v197 = vadd.f32 %v100, %v196
    %v198 = vpop.f32.mrf.mxu0
    %v199 = vadd.f32 %v104, %v198
    %200 = vdwg.mxu0
    %201 = vmatprep.subr.mxu0 0.0
    %202 = vmatpush1.msra.mxu0 %v94
    %203 = vmatprep.subr.mxu0 0.0
    %204 = vmatpush1.msra.mxu0 %v91
    %205 = vmatprep.subr.mxu0 0.0
    %206 = vmatpush1.msra.mxu0 %v88
    %207 = vmatprep.subr.mxu0 0.0
    %208 = vmatpush1.msra.mxu0 %v85
    %209 = vmatprep.subr.mxu0 0.0
    %210 = vmatpush1.msra.mxu0 %v82
    %211 = vmatprep.subr.mxu0 0.0
    %212 = vmatpush1.msra.mxu0 %v79
    %213 = vmatprep.subr.mxu0 0.0
    %214 = vmatpush1.msra.mxu0 %v76
    %215 = vmatprep.subr.mxu0 0.0
    %216 = vmatpush1.msra.mxu0 %v73
    %217 = vmatprep.subr.mxu0 0.0
    %218 = vmatpush1.msra.mxu0 %v70
    %219 = vmatprep.subr.mxu0 0.0
    %220 = vmatpush1.msra.mxu0 %v67
    %221 = vmatprep.subr.mxu0 0.0
    %222 = vmatpush1.msra.mxu0 %v64
    %223 = vmatprep.subr.mxu0 0.0
    %224 = vmatpush1.msra.mxu0 %v61
    %225 = vmatprep.subr.mxu0 0.0
    %226 = vmatpush1.msra.mxu0 %v58
    %227 = vmatprep.subr.mxu0 0.0
    %228 = vmatpush1.msra.mxu0 %v55
    %229 = vmatprep.subr.mxu0 0.0
    %230 = vmatpush1.msra.mxu0 %v52
    %231 = vmatprep.subr.mxu0 0.0
    %232 = vmatpush1.msra.mxu0 %v49
    %233 = vmatprep.subr.mxu0 0.0
    %234 = vmatpush2.msra.mxu0 0.0
    %235 = vmatprep.subr.mxu0 0.0
    %236 = vmatpush2.msra.mxu0 0.0
    %237 = vmatprep.subr.mxu0 0.0
    %238 = vmatpush2.msra.mxu0 0.0
    %239 = vmatprep.subr.mxu0 0.0
    %240 = vmatpush2.msra.mxu0 0.0
    %241 = vmatprep.subr.mxu0 0.0
    %242 = vmatpush2.msra.mxu0 0.0
    %243 = vmatprep.subr.mxu0 0.0
    %244 = vmatpush2.msra.mxu0 0.0
    %245 = vmatprep.subr.mxu0 0.0
    %246 = vmatpush2.msra.mxu0 0.0
    %247 = vmatprep.subr.mxu0 0.0
    %248 = vmatpush2.msra.mxu0 0.0
    %249 = vmatprep.subr.mxu0 0.0
    %250 = vmatpush2.msra.mxu0 0.0
    %251 = vmatprep.subr.mxu0 0.0
    %252 = vmatpush2.msra.mxu0 0.0
    %253 = vmatprep.subr.mxu0 0.0
    %254 = vmatpush2.msra.mxu0 0.0
    %255 = vmatprep.subr.mxu0 0.0
    %256 = vmatpush2.msra.mxu0 0.0
    %257 = vmatprep.subr.mxu0 0.0
    %258 = vmatpush2.msra.mxu0 0.0
    %259 = vmatprep.subr.mxu0 0.0
    %260 = vmatpush2.msra.mxu0 0.0
    %261 = vmatprep.subr.mxu0 0.0
    %262 = vmatpush2.msra.mxu0 0.0
    %263 = vmatprep.subr.mxu0 0.0
    %264 = vmatpush2.msra.mxu0 0.0
    %265 = vmatprep.mubr.f32.mxu0 0.0
    %266 = vmatmul.mubr.f32.gmra.mxu0 %v43
    %v267 = vpop.f32.mrf.mxu0
    %v268 = vadd.f32 %v108, %v267
    %v269 = vpop.f32.mrf.mxu0
    %270 = vmatprep.mubr.f32.mxu0 0.0
    %271 = vmatmul.mubr.f32.gmra.mxu0 %v44
    %v272 = vpop.f32.mrf.mxu0
    %v273 = vadd.f32 %v108, %v272
    %v274 = vpop.f32.mrf.mxu0
    %275 = vmatprep.mubr.f32.mxu0 0.0
    %276 = vmatmul.mubr.f32.gmra.mxu0 %v45
    %v277 = vpop.f32.mrf.mxu0
    %v278 = vadd.f32 %v108, %v277
    %v279 = vpop.f32.mrf.mxu0
    %280 = vmatprep.mubr.f32.mxu0 0.0
    %281 = vmatmul.mubr.f32.gmra.mxu0 %v46
    %v282 = vpop.f32.mrf.mxu0
    %v283 = vadd.f32 %v108, %v282
    %v284 = vpop.f32.mrf.mxu0
    %285 = vdwg.mxu0
    %286 = vst [vmem:[#allocation7] sm:$0xff] %v179
    %287 = vst [vmem:[#allocation7 + $0x8] sm:$0xff] %v181
    %288 = vst [vmem:[#allocation7 + $0x10] sm:$0xff] %v268
    %289 = vst [vmem:[#allocation7 + $0x18] sm:$0xff] %v185
    %290 = vst [vmem:[#allocation7 + $0x20] sm:$0xff] %v187
    %291 = vst [vmem:[#allocation7 + $0x28] sm:$0xff] %v273
    %292 = vst [vmem:[#allocation7 + $0x30] sm:$0xff] %v191
    %293 = vst [vmem:[#allocation7 + $0x38] sm:$0xff] %v193
    %294 = vst [vmem:[#allocation7 + $0x40] sm:$0xff] %v278
    %295 = vst [vmem:[#allocation7 + $0x48] sm:$0xff] %v197
    %296 = vst [vmem:[#allocation7 + $0x50] sm:$0xff] %v199
    %297 = vst [vmem:[#allocation7 + $0x58] sm:$0xff] %v283
    // Predicated region
    $region22: #{tpu_custom_call.1} parent=1 // pred_check
      _
    $region23: #{tpu_custom_call.1} parent=1 // pred_check_branch
      %299 = sbr.rel (0) target = $region25
    $region24: #{tpu_custom_call.1} parent=1 // pred_region
      %s301 = ssub.s32 1536, 1536
      %302 = vsyncadd [#allocation4], %s301
      %s303 = sshll.u32 [#allocation7], 4
      %s304 = int_to_ptr.vmem [resolvable:$true] %s303
      %309 = dma.vmem_to_hbm [thread:$0]  %s304, 1536, %s3, [#allocation4], 384, 384, 24
    $region25: #{tpu_custom_call.1} parent=1 // pred_fallthru
      _
    // Predicated region
    $region26: #{tpu_custom_call.1} parent=1 // pred_check
      _
    $region27: #{tpu_custom_call.1} parent=1 // pred_check_branch
      %311 = sbr.rel (0) target = $region29
    $region28: #{tpu_custom_call.1} parent=1 // pred_region
      %312 = dma.done [#allocation4], 1536
    $region29: #{tpu_custom_call.1} parent=1 // pred_fallthru
      _
    %313 = vsyncpa [#allocation3], 1
    %314 = vsyncpa [#allocation6], 1
    %315 = vsyncpa [#allocation4], 1

</llo_original>
